<compile_context>
chip_gen: v5e
topology: v5e:2x2
jax: 0.10.0
libtpu: 0.0.40
codegen_flags: <defaults>
</compile_context>

<pallas_src>
import math

import jax
import jax.numpy as jnp
from jax import lax
from jax.experimental import pallas as pl
from jax.experimental.pallas import tpu as pltpu


def _round_up(x, m):
    return (x + m - 1) // m * m


def _gelu_exact(x):
    # nn.GELU() default is the exact (erf-based) GELU; erf goes to the EUP.
    # (tanh-approx GELU would also be fine if the accuracy contract allows it.)
    return 0.5 * x * (1.0 + lax.erf(x * 0.7071067811865476))


def mlp_kernel(x_ref, w1_ref, b1_ref, w2_ref, b2_ref, o_ref):
    # fc1: (tm, C) @ (C, H) with f32 accumulation; bias + GELU in f32.
    h = jnp.dot(x_ref[...], w1_ref[...], preferred_element_type=jnp.float32)
    h = _gelu_exact(h + b1_ref[...])
    # dropout(p=0.0) == identity.
    # fc2: (tm, H) @ (H, O) with f32 accumulation; f32 bias; cast to out dtype.
    # Note: h is rounded to the compute dtype (e.g. bf16) before the 2nd matmul.
    y = jnp.dot(h.astype(w2_ref.dtype), w2_ref[...],
                preferred_element_type=jnp.float32)
    o_ref[...] = (y + b2_ref[...]).astype(o_ref.dtype)


def mlp_pallas(x, w1, b1, w2, b2, *, tm_max=256, compute_dtype=None,
               vmem_budget_bytes=40 * 2**20):
    """x: (B, N, C). w1: (C, H), b1: (H,), w2: (H, O), b2: (O,)."""
    B, N, C = x.shape
    Cw, H = w1.shape
    Hw, O = w2.shape
    assert Cw == C and Hw == H and b1.shape == (H,) and b2.shape == (O,)

    out_dtype = x.dtype
    cdt = jnp.dtype(compute_dtype) if compute_dtype is not None else jnp.dtype(x.dtype)
    cb = cdt.itemsize
    ob = jnp.dtype(out_dtype).itemsize

    M = B * N
    # Lane-dense feature dims (multiples of 128).
    Cp, Hp, Op = (_round_up(d, 128) for d in (C, H, O))

    # VMEM footprint: resident weights + double-buffered x/out tiles + f32
    # intermediates.  Shrink the token tile until it fits the budget (keeps
    # the (tm, H) f32 intermediate bounded, and keeps v7x's 64 MiB VMEM happy).
    w_bytes = (Cp * Hp + Hp * Op) * cb + (Hp + Op) * 4

    def vmem_est(t):
        return (w_bytes
                + 2 * t * Cp * cb      # x tile, double-buffered
                + 2 * t * Op * ob      # out tile, double-buffered
                + t * Hp * 4           # fc1/GELU intermediate (f32)
                + t * Op * 4)          # fc2 f32 accumulator

    tm = max(8, min(tm_max, _round_up(M, 8)))
    while tm > 8 and vmem_est(tm) > vmem_budget_bytes:
        tm //= 2
    tm = max(8, (tm // 8) * 8)

    M_pad = _round_up(M, tm)
    grid = (M_pad // tm,)

    # Pad operands; matmul operands in the compute dtype (bf16 recommended),
    # biases stay f32 (the epilogue runs in f32).
    x2d = jnp.pad(x.reshape(M, C).astype(cdt), ((0, M_pad - M), (0, Cp - C)))
    w1p = jnp.pad(w1.astype(cdt), ((0, Cp - C), (0, Hp - H)))
    w2p = jnp.pad(w2.astype(cdt), ((0, Hp - H), (0, Op - O)))
    b1p = jnp.pad(b1.astype(jnp.float32), (0, Hp - H)).reshape(1, Hp)
    b2p = jnp.pad(b2.astype(jnp.float32), (0, Op - O)).reshape(1, Op)

    cost = pl.CostEstimate(
        flops=int(2 * M_pad * (Cp * Hp + Hp * Op)),
        transcendentals=int(M_pad * Hp),
        bytes_accessed=int(x2d.size * cb + w1p.size * cb + w2p.size * cb
                           + b1p.size * 4 + b2p.size * 4 + M_pad * Op * ob),
    )
    compiler_params = pltpu.CompilerParams(
        # "parallel" token axis -> shards grid steps across v7x's 2 TensorCores.
        dimension_semantics=("parallel",),
        vmem_limit_bytes=int(min(max(2 * vmem_est(tm) + (2 << 20), 32 << 20),
                                 64 << 20)),
    )

    def build(weight_spec_fn):
        return pl.pallas_call(
            mlp_kernel,
            out_shape=jax.ShapeDtypeStruct((M_pad, Op), out_dtype),
            grid_spec=pltpu.PrefetchScalarGridSpec(
                num_scalar_prefetch=0,
                grid=grid,
                in_specs=[
                    pl.BlockSpec((tm, Cp), lambda i: (i, 0)),  # x tile (pipelined)
                    weight_spec_fn((Cp, Hp)),                  # w1 (resident)
                    weight_spec_fn((1, Hp)),                   # b1 (resident)
                    weight_spec_fn((Hp, Op)),                  # w2 (resident)
                    weight_spec_fn((1, Op)),                   # b2 (resident)
                ],
                out_specs=pl.BlockSpec((tm, Op), lambda i: (i, 0)),
            ),
            compiler_params=compiler_params,
            cost_estimate=cost,
        )

    # Preferred: whole-array VMEM residency (single copy, no double-buffering).
    resident = lambda shape: pl.BlockSpec(memory_space=pltpu.MemorySpace.VMEM)
    try:
        out2d = build(resident)(x2d, w1p, b1p, w2p, b2p)
    except Exception:
        # Safety net: full-shape blocked specs with a constant index map
        # (Pallas only copies these once since the block index never changes).
        blocked = lambda shape: pl.BlockSpec(shape, lambda i, _s=shape: (0,) * len(_s))
        out2d = build(blocked)(x2d, w1p, b1p, w2p, b2p)

    return out2d[:M, :O].reshape(B, N, O)


def mlp_reference(x, w1, b1, w2, b2):
    h = jnp.einsum("bnc,ch->bnh", x, w1) + b1
    h = 0.5 * h * (1.0 + lax.erf(h * 0.7071067811865476))
    return jnp.einsum("bnh,ho->bno", h, w2) + b2


if __name__ == "__main__":
    # Small shapes consistent with the module: batch=2, seq=8, in=32, hidden=64, out=32
    B, N = 2, 8
    in_features, hidden_features, out_features = 32, 64, 32

    key = jax.random.PRNGKey(0)
    kx, kw1, kb1, kw2, kb2 = jax.random.split(key, 5)

    x = jax.random.normal(kx, (B, N, in_features), dtype=jnp.float32)

    # nn.Linear-style uniform init, pre-transposed to (in, hidden)/(hidden, out).
    bound1 = 1.0 / math.sqrt(in_features)
    w1 = jax.random.uniform(kw1, (in_features, hidden_features),
                            minval=-bound1, maxval=bound1, dtype=jnp.float32)
    b1 = jax.random.uniform(kb1, (hidden_features,),
                            minval=-bound1, maxval=bound1, dtype=jnp.float32)
    bound2 = 1.0 / math.sqrt(hidden_features)
    w2 = jax.random.uniform(kw2, (hidden_features, out_features),
                            minval=-bound2, maxval=bound2, dtype=jnp.float32)
    b2 = jax.random.uniform(kb2, (out_features,),
                            minval=-bound2, maxval=bound2, dtype=jnp.float32)

    ref = mlp_reference(x, w1, b1, w2, b2)

    # f32 compute path (tight numerical check vs reference).
    out_f32 = jax.block_until_ready(mlp_pallas(x, w1, b1, w2, b2))
    assert out_f32.shape == (B, N, out_features)
    assert jnp.allclose(out_f32, ref, atol=1e-5, rtol=1e-5), "f32 mismatch vs reference"

    # bf16 compute path (MXU-native dtype) with f32 accumulation/epilogue.
    out_bf16 = jax.block_until_ready(
        mlp_pallas(x, w1, b1, w2, b2, compute_dtype=jnp.bfloat16))
    assert out_bf16.shape == (B, N, out_features)
    assert jnp.allclose(out_bf16, ref, atol=5e-2, rtol=5e-2), "bf16 mismatch vs reference"

    print("KERNEL_OK")
</pallas_src>

<mosaic_0001>
module attributes {stable_mosaic.version = 11 : i64} {
  func.func @mlp_kernel(%arg0: i32, %arg1: memref<16x128xf32, #tpu.memory_space<vmem>>, %arg2: memref<128x128xf32, #tpu.memory_space<vmem>>, %arg3: memref<1x128xf32, #tpu.memory_space<vmem>>, %arg4: memref<128x128xf32, #tpu.memory_space<vmem>>, %arg5: memref<1x128xf32, #tpu.memory_space<vmem>>, %arg6: memref<16x128xf32, #tpu.memory_space<vmem>>) attributes {dimension_semantics = [#tpu.dimension_semantics<parallel>], iteration_bounds = array<i64: 1>, scalar_prefetch = 0 : i64, scratch_operands = 0 : i64, tpu.core_type = #tpu.core_type<tc>, window_params = [{transform_indices = @transform_0, window_bounds = array<i64: 16, 128>}, {pipeline_mode = #tpu.pipeline_mode<synchronous>, transform_indices = @transform_1, window_bounds = array<i64: 128, 128>}, {pipeline_mode = #tpu.pipeline_mode<synchronous>, transform_indices = @transform_2, window_bounds = array<i64: 1, 128>}, {pipeline_mode = #tpu.pipeline_mode<synchronous>, transform_indices = @transform_3, window_bounds = array<i64: 128, 128>}, {pipeline_mode = #tpu.pipeline_mode<synchronous>, transform_indices = @transform_4, window_bounds = array<i64: 1, 128>}, {transform_indices = @transform_5, window_bounds = array<i64: 16, 128>}]} {
    %c0 = arith.constant 0 : index
    %c0_0 = arith.constant 0 : index
    %0 = vector.load %arg1[%c0, %c0_0] : memref<16x128xf32, #tpu.memory_space<vmem>>, vector<16x128xf32>
    %c0_1 = arith.constant 0 : index
    %c0_2 = arith.constant 0 : index
    %1 = vector.load %arg2[%c0_1, %c0_2] : memref<128x128xf32, #tpu.memory_space<vmem>>, vector<128x128xf32>
    %cst = arith.constant dense<0.000000e+00> : vector<16x128xf32>
    %2 = tpu.matmul %0, %1, %cst {dimension_numbers = #tpu.dot_dimension_numbers<[1], [0], [0], [1], [0, 0, 1, 1], [], []>} : vector<16x128xf32>, vector<128x128xf32>, vector<16x128xf32> -> vector<16x128xf32>
    %c0_3 = arith.constant 0 : index
    %c0_4 = arith.constant 0 : index
    %3 = vector.load %arg3[%c0_3, %c0_4] : memref<1x128xf32, #tpu.memory_space<vmem>>, vector<1x128xf32>
    %4 = vector.broadcast %3 : vector<1x128xf32> to vector<16x128xf32>
    %5 = arith.addf %2, %4 : vector<16x128xf32>
    %cst_5 = arith.constant 5.000000e-01 : f32
    %6 = vector.broadcast %cst_5 : f32 to vector<16x128xf32>
    %7 = arith.mulf %6, %5 : vector<16x128xf32>
    %cst_6 = arith.constant 0.707106769 : f32
    %8 = vector.broadcast %cst_6 : f32 to vector<16x128xf32>
    %9 = arith.mulf %5, %8 : vector<16x128xf32>
    %10 = math.erf %9 : vector<16x128xf32>
    %cst_7 = arith.constant 1.000000e+00 : f32
    %11 = vector.broadcast %cst_7 : f32 to vector<16x128xf32>
    %12 = arith.addf %11, %10 : vector<16x128xf32>
    %13 = arith.mulf %7, %12 : vector<16x128xf32>
    %c0_8 = arith.constant 0 : index
    %c0_9 = arith.constant 0 : index
    %14 = vector.load %arg4[%c0_8, %c0_9] : memref<128x128xf32, #tpu.memory_space<vmem>>, vector<128x128xf32>
    %cst_10 = arith.constant dense<0.000000e+00> : vector<16x128xf32>
    %15 = tpu.matmul %13, %14, %cst_10 {dimension_numbers = #tpu.dot_dimension_numbers<[1], [0], [0], [1], [0, 0, 1, 1], [], []>} : vector<16x128xf32>, vector<128x128xf32>, vector<16x128xf32> -> vector<16x128xf32>
    %c0_11 = arith.constant 0 : index
    %c0_12 = arith.constant 0 : index
    %16 = vector.load %arg5[%c0_11, %c0_12] : memref<1x128xf32, #tpu.memory_space<vmem>>, vector<1x128xf32>
    %17 = vector.broadcast %16 : vector<1x128xf32> to vector<16x128xf32>
    %18 = arith.addf %15, %17 : vector<16x128xf32>
    %c0_13 = arith.constant 0 : index
    %c0_14 = arith.constant 0 : index
    %19 = vector.load %arg6[%c0_13, %c0_14] : memref<16x128xf32, #tpu.memory_space<vmem>>, vector<16x128xf32>
    tpu.vector_store %arg6[%c0_13, %c0_14], %18 {strides = array<i32>} : memref<16x128xf32, #tpu.memory_space<vmem>>, vector<16x128xf32>,
    return
  }
  func.func @transform_0(%arg0: i32) -> (i32, i32) {
    %c0_i32 = arith.constant 0 : i32
    %c0_i32_0 = arith.constant 0 : i32
    return %arg0, %c0_i32 : i32, i32
  }
  func.func @transform_1(%arg0: i32) -> (i32, i32) {
    %c0_i32 = arith.constant 0 : i32
    %c0_i32_0 = arith.constant 0 : i32
    %c0_i32_1 = arith.constant 0 : i32
    return %c0_i32, %c0_i32_0 : i32, i32
  }
  func.func @transform_2(%arg0: i32) -> (i32, i32) {
    %c0_i32 = arith.constant 0 : i32
    %c0_i32_0 = arith.constant 0 : i32
    %c0_i32_1 = arith.constant 0 : i32
    return %c0_i32, %c0_i32_0 : i32, i32
  }
  func.func @transform_3(%arg0: i32) -> (i32, i32) {
    %c0_i32 = arith.constant 0 : i32
    %c0_i32_0 = arith.constant 0 : i32
    %c0_i32_1 = arith.constant 0 : i32
    return %c0_i32, %c0_i32_0 : i32, i32
  }
  func.func @transform_4(%arg0: i32) -> (i32, i32) {
    %c0_i32 = arith.constant 0 : i32
    %c0_i32_0 = arith.constant 0 : i32
    %c0_i32_1 = arith.constant 0 : i32
    return %c0_i32, %c0_i32_0 : i32, i32
  }
  func.func @transform_5(%arg0: i32) -> (i32, i32) {
    %c0_i32 = arith.constant 0 : i32
    %c0_i32_0 = arith.constant 0 : i32
    return %arg0, %c0_i32 : i32, i32
  }
}

module attributes {stable_mosaic.version = 11 : i64} {
  func.func @mlp_kernel(%arg0: i32, %arg1: memref<16x128xf32, #tpu.memory_space<vmem>>, %arg2: memref<128x128xf32, #tpu.memory_space<vmem>>, %arg3: memref<1x128xf32, #tpu.memory_space<vmem>>, %arg4: memref<128x128xf32, #tpu.memory_space<vmem>>, %arg5: memref<1x128xf32, #tpu.memory_space<vmem>>, %arg6: memref<16x128xf32, #tpu.memory_space<vmem>>) attributes {dimension_semantics = [#tpu.dimension_semantics<parallel>], iteration_bounds = array<i64: 1>, scalar_prefetch = 0 : i64, scratch_operands = 0 : i64, tpu.core_type = #tpu.core_type<tc>, window_params = [{transform_indices = @transform_0, window_bounds = array<i64: 16, 128>}, {pipeline_mode = #tpu.pipeline_mode<synchronous>, transform_indices = @transform_1, window_bounds = array<i64: 128, 128>}, {pipeline_mode = #tpu.pipeline_mode<synchronous>, transform_indices = @transform_2, window_bounds = array<i64: 1, 128>}, {pipeline_mode = #tpu.pipeline_mode<synchronous>, transform_indices = @transform_3, window_bounds = array<i64: 128, 128>}, {pipeline_mode = #tpu.pipeline_mode<synchronous>, transform_indices = @transform_4, window_bounds = array<i64: 1, 128>}, {transform_indices = @transform_5, window_bounds = array<i64: 16, 128>}]} {
    %c0 = arith.constant 0 : index
    %c0_0 = arith.constant 0 : index
    %0 = vector.load %arg1[%c0, %c0_0] : memref<16x128xf32, #tpu.memory_space<vmem>>, vector<16x128xf32>
    %c0_1 = arith.constant 0 : index
    %c0_2 = arith.constant 0 : index
    %1 = vector.load %arg2[%c0_1, %c0_2] : memref<128x128xf32, #tpu.memory_space<vmem>>, vector<128x128xf32>
    %cst = arith.constant dense<0.000000e+00> : vector<16x128xf32>
    %2 = tpu.matmul %0, %1, %cst {dimension_numbers = #tpu.dot_dimension_numbers<[1], [0], [0], [1], [0, 0, 1, 1], [], []>} : vector<16x128xf32>, vector<128x128xf32>, vector<16x128xf32> -> vector<16x128xf32>
    %c0_3 = arith.constant 0 : index
    %c0_4 = arith.constant 0 : index
    %3 = vector.load %arg3[%c0_3, %c0_4] : memref<1x128xf32, #tpu.memory_space<vmem>>, vector<1x128xf32>
    %4 = vector.broadcast %3 : vector<1x128xf32> to vector<16x128xf32>
    %5 = arith.addf %2, %4 : vector<16x128xf32>
    %cst_5 = arith.constant 5.000000e-01 : f32
    %6 = vector.broadcast %cst_5 : f32 to vector<16x128xf32>
    %7 = arith.mulf %6, %5 : vector<16x128xf32>
    %cst_6 = arith.constant 0.707106769 : f32
    %8 = vector.broadcast %cst_6 : f32 to vector<16x128xf32>
    %9 = arith.mulf %5, %8 : vector<16x128xf32>
    %10 = math.erf %9 : vector<16x128xf32>
    %cst_7 = arith.constant 1.000000e+00 : f32
    %11 = vector.broadcast %cst_7 : f32 to vector<16x128xf32>
    %12 = arith.addf %11, %10 : vector<16x128xf32>
    %13 = arith.mulf %7, %12 : vector<16x128xf32>
    %c0_8 = arith.constant 0 : index
    %c0_9 = arith.constant 0 : index
    %14 = vector.load %arg4[%c0_8, %c0_9] : memref<128x128xf32, #tpu.memory_space<vmem>>, vector<128x128xf32>
    %cst_10 = arith.constant dense<0.000000e+00> : vector<16x128xf32>
    %15 = tpu.matmul %13, %14, %cst_10 {dimension_numbers = #tpu.dot_dimension_numbers<[1], [0], [0], [1], [0, 0, 1, 1], [], []>} : vector<16x128xf32>, vector<128x128xf32>, vector<16x128xf32> -> vector<16x128xf32>
    %c0_11 = arith.constant 0 : index
    %c0_12 = arith.constant 0 : index
    %16 = vector.load %arg5[%c0_11, %c0_12] : memref<1x128xf32, #tpu.memory_space<vmem>>, vector<1x128xf32>
    %17 = vector.broadcast %16 : vector<1x128xf32> to vector<16x128xf32>
    %18 = arith.addf %15, %17 : vector<16x128xf32>
    %c0_13 = arith.constant 0 : index
    %c0_14 = arith.constant 0 : index
    %19 = vector.load %arg6[%c0_13, %c0_14] : memref<16x128xf32, #tpu.memory_space<vmem>>, vector<16x128xf32>
    tpu.vector_store %arg6[%c0_13, %c0_14], %18 {strides = array<i32>} : memref<16x128xf32, #tpu.memory_space<vmem>>, vector<16x128xf32>,
    return
  }
  func.func @transform_0(%arg0: i32) -> (i32, i32) {
    %c0_i32 = arith.constant 0 : i32
    %c0_i32_0 = arith.constant 0 : i32
    return %arg0, %c0_i32 : i32, i32
  }
  func.func @transform_1(%arg0: i32) -> (i32, i32) {
    %c0_i32 = arith.constant 0 : i32
    %c0_i32_0 = arith.constant 0 : i32
    %c0_i32_1 = arith.constant 0 : i32
    return %c0_i32, %c0_i32_0 : i32, i32
  }
  func.func @transform_2(%arg0: i32) -> (i32, i32) {
    %c0_i32 = arith.constant 0 : i32
    %c0_i32_0 = arith.constant 0 : i32
    %c0_i32_1 = arith.constant 0 : i32
    return %c0_i32, %c0_i32_0 : i32, i32
  }
  func.func @transform_3(%arg0: i32) -> (i32, i32) {
    %c0_i32 = arith.constant 0 : i32
    %c0_i32_0 = arith.constant 0 : i32
    %c0_i32_1 = arith.constant 0 : i32
    return %c0_i32, %c0_i32_0 : i32, i32
  }
  func.func @transform_4(%arg0: i32) -> (i32, i32) {
    %c0_i32 = arith.constant 0 : i32
    %c0_i32_0 = arith.constant 0 : i32
    %c0_i32_1 = arith.constant 0 : i32
    return %c0_i32, %c0_i32_0 : i32, i32
  }
  func.func @transform_5(%arg0: i32) -> (i32, i32) {
    %c0_i32 = arith.constant 0 : i32
    %c0_i32_0 = arith.constant 0 : i32
    return %arg0, %c0_i32 : i32, i32
  }
}

</mosaic_0001>

<llo_original>
// kernel: tpu_custom_call.1
$region0: #{tpu_custom_call.1}
  #allocation0 [shape = 'u32[]', space=smem, size = 0x4, offset = 0x4, fixed_abs, tag = 'smem constant byte address 0x4 - core index']
  #allocation1 [shape = 'u32[72,128]{1,0:T(1,128)}', space=vmem, size = 0x9000, scoped, tag = 'internal scratch']
  %s0 = inlined_call_operand.hbm [shape: f32[16,128], index: 0, kind: input, shape index: {}]
  %s1 = inlined_call_operand.hbm [shape: f32[128,128], index: 1, kind: input, shape index: {}]
  %s2 = inlined_call_operand.vmem [shape: f32[1,128], index: 2, kind: input, shape index: {}]
  %s3 = inlined_call_operand.hbm [shape: f32[128,128], index: 3, kind: input, shape index: {}]
  %s4 = inlined_call_operand.vmem [shape: f32[1,128], index: 4, kind: input, shape index: {}]
  %s5 = inlined_call_operand.hbm [shape: f32[16,128], index: 5, kind: output, shape index: {}]
  %s6 = sld [smem:[#allocation0]]
  $region42: #{tpu_custom_call.1} parent=0
    _
  %s8 = ssub.s32 1, %s6
  %s9 = scalar_select 0, %s8, %s6
  $region1: #{tpu_custom_call.1} parent=0
    #allocation2 [shape = 'u8[8192]{0}', space=vmem, size = 0x2000, scoped, tag = 'input window, operand 0, single buffered']
    #allocation3 [shape = 's32[1]{0}', space=sflag, size = 0x4, scoped, tag = 'scoped memory for tpu_custom_call.1']
    #allocation4 [shape = 's32[1]{0}', space=sflag, size = 0x4, scoped, tag = 'scoped memory for tpu_custom_call.1']
    #allocation5 [shape = 'u8[65536]{0}', space=vmem, size = 0x10000, scoped, tag = 'input window, operand 1, single buffered']
    #allocation6 [shape = 's32[1]{0}', space=sflag, size = 0x4, scoped, tag = 'scoped memory for tpu_custom_call.1']
    #allocation7 [shape = 'u8[65536]{0}', space=vmem, size = 0x10000, scoped, tag = 'input window, operand 3, single buffered']
    #allocation8 [shape = 'u8[8192]{0}', space=vmem, size = 0x2000, scoped, tag = 'output window, operand 0, single buffered']
    %10 = vsyncpa [#allocation3], 0
    %11 = vsyncpa [#allocation6], 0
    %12 = vsyncpa [#allocation4], 0
    // Predicated region
    $region2: #{tpu_custom_call.1} parent=1 // pred_check
      _
    $region3: #{tpu_custom_call.1} parent=1 // pred_check_branch
      %14 = sbr.rel (0) target = $region5
    $region4: #{tpu_custom_call.1} parent=1 // pred_region
      %16 = vsyncadd [#allocation3], 0
      %s17 = sshll.u32 %s0, 4
      %s18 = int_to_ptr.hbm [resolvable:$true] %s17
      %s19 = sshll.u32 [#allocation2], 4
      %s20 = int_to_ptr.vmem [resolvable:$true] %s19
      %25 = dma.hbm_to_vmem [thread:$0]  %s18, 256, %s20, [#allocation3], 128, 128, 8
    $region5: #{tpu_custom_call.1} parent=1 // pred_fallthru
      _
    // Predicated region
    $region6: #{tpu_custom_call.1} parent=1 // pred_check
      _
    $region7: #{tpu_custom_call.1} parent=1 // pred_check_branch
      %27 = sbr.rel (0) target = $region9
    $region8: #{tpu_custom_call.1} parent=1 // pred_region
      %29 = vsyncadd [#allocation6], 0
      %s30 = sshll.u32 %s1, 4
      %s31 = int_to_ptr.hbm [resolvable:$true] %s30
      %s32 = sshll.u32 [#allocation5], 4
      %s33 = int_to_ptr.vmem [resolvable:$true] %s32
      %38 = dma.hbm_to_vmem [thread:$0]  %s31, 2048, %s33, [#allocation6], 128, 128, 8
    $region9: #{tpu_custom_call.1} parent=1 // pred_fallthru
      _
    // Predicated region
    $region10: #{tpu_custom_call.1} parent=1 // pred_check
      _
    $region11: #{tpu_custom_call.1} parent=1 // pred_check_branch
      %40 = sbr.rel (0) target = $region13
    $region12: #{tpu_custom_call.1} parent=1 // pred_region
      _
    $region13: #{tpu_custom_call.1} parent=1 // pred_fallthru
      _
    // Predicated region
    $region14: #{tpu_custom_call.1} parent=1 // pred_check
      _
    $region15: #{tpu_custom_call.1} parent=1 // pred_check_branch
      %42 = sbr.rel (0) target = $region17
    $region16: #{tpu_custom_call.1} parent=1 // pred_region
      %44 = vsyncadd [#allocation6], 0
      %s45 = sshll.u32 %s3, 4
      %s46 = int_to_ptr.hbm [resolvable:$true] %s45
      %s47 = sshll.u32 [#allocation7], 4
      %s48 = int_to_ptr.vmem [resolvable:$true] %s47
      %53 = dma.hbm_to_vmem [thread:$0]  %s46, 2048, %s48, [#allocation6], 128, 128, 8
    $region17: #{tpu_custom_call.1} parent=1 // pred_fallthru
      _
    // Predicated region
    $region18: #{tpu_custom_call.1} parent=1 // pred_check
      _
    $region19: #{tpu_custom_call.1} parent=1 // pred_check_branch
      %55 = sbr.rel (0) target = $region21
    $region20: #{tpu_custom_call.1} parent=1 // pred_region
      _
    $region21: #{tpu_custom_call.1} parent=1 // pred_fallthru
      _
    // Predicated region
    $region22: #{tpu_custom_call.1} parent=1 // pred_check
      _
    $region23: #{tpu_custom_call.1} parent=1 // pred_check_branch
      %57 = sbr.rel (0) target = $region25
    $region24: #{tpu_custom_call.1} parent=1 // pred_region
      %59 = dma.done [#allocation3], 256
    $region25: #{tpu_custom_call.1} parent=1 // pred_fallthru
      _
    // Predicated region
    $region26: #{tpu_custom_call.1} parent=1 // pred_check
      _
    $region27: #{tpu_custom_call.1} parent=1 // pred_check_branch
      %61 = sbr.rel (0) target = $region29
    $region28: #{tpu_custom_call.1} parent=1 // pred_region
      %63 = dma.done [#allocation6], 2048
    $region29: #{tpu_custom_call.1} parent=1 // pred_fallthru
      _
    // Predicated region
    $region30: #{tpu_custom_call.1} parent=1 // pred_check
      _
    $region31: #{tpu_custom_call.1} parent=1 // pred_check_branch
      %65 = sbr.rel (0) target = $region33
    $region32: #{tpu_custom_call.1} parent=1 // pred_region
      %67 = dma.done [#allocation6], 2048
    $region33: #{tpu_custom_call.1} parent=1 // pred_fallthru
      _
    %v68 = vld [vmem:[#allocation2] sm:$0xff]
    %v69 = vld [vmem:[#allocation2 + $0x8] sm:$0xff]
    %v70 = vld [vmem:[#allocation5] sm:$0xff]
    %v71 = vld [vmem:[#allocation5 + $0x8] sm:$0xff]
    %v72 = vld [vmem:[#allocation5 + $0x10] sm:$0xff]
    %v73 = vld [vmem:[#allocation5 + $0x18] sm:$0xff]
    %v74 = vld [vmem:[#allocation5 + $0x20] sm:$0xff]
    %v75 = vld [vmem:[#allocation5 + $0x28] sm:$0xff]
    %v76 = vld [vmem:[#allocation5 + $0x30] sm:$0xff]
    %v77 = vld [vmem:[#allocation5 + $0x38] sm:$0xff]
    %v78 = vld [vmem:[#allocation5 + $0x40] sm:$0xff]
    %v79 = vld [vmem:[#allocation5 + $0x48] sm:$0xff]
    %v80 = vld [vmem:[#allocation5 + $0x50] sm:$0xff]
    %v81 = vld [vmem:[#allocation5 + $0x58] sm:$0xff]
    %v82 = vld [vmem:[#allocation5 + $0x60] sm:$0xff]
    %v83 = vld [vmem:[#allocation5 + $0x68] sm:$0xff]
    %v84 = vld [vmem:[#allocation5 + $0x70] sm:$0xff]
    %v85 = vld [vmem:[#allocation5 + $0x78] sm:$0xff]
    %v86 = vld [vmem:[%s2] sm:$0x1]
    %v88 = vperm.slane %v86, 0
    %90 = vmatpush.msra.mxu0 %v85
    %91 = vmatpush.msra.mxu0 %v84
    %92 = vmatpush.msra.mxu0 %v83
    %93 = vmatpush.msra.mxu0 %v82
    %94 = vmatpush.msra.mxu0 %v81
    %95 = vmatpush.msra.mxu0 %v80
    %96 = vmatpush.msra.mxu0 %v79
    %97 = vmatpush.msra.mxu0 %v78
    %98 = vmatpush.msra.mxu0 %v77
    %99 = vmatpush.msra.mxu0 %v76
    %100 = vmatpush.msra.mxu0 %v75
    %101 = vmatpush.msra.mxu0 %v74
    %102 = vmatpush.msra.mxu0 %v73
    %103 = vmatpush.msra.mxu0 %v72
    %104 = vmatpush.msra.mxu0 %v71
    %105 = vmatpush.msra.mxu0 %v70
    %106 = vmatmul.f32.gmra.mxu0 %v68
    %v107 = vpop.f32.mrf.mxu0
    %v108 = vadd.f32 %v88, %v107
    %109 = vmatmul.f32.gmra.mxu0 %v69
    %v110 = vpop.f32.mrf.mxu0
    %v111 = vadd.f32 %v88, %v110
    %112 = vdwg.mxu0
    %v113 = vmul.f32 %v108, 0.5
    %v114 = vmul.f32 %v111, 0.5
    %v115 = vmul.f32 %v108, 0.70710677
    %v116 = vmul.f32 %v111, 0.70710677
    %v117 = vmul.f32 %v115, %v115
    %v118 = vmin.f32 16.0, %v117
    %v119 = vmul.f32 %v118, 2.1237322e-06
    %v120 = vadd.f32 %v119, 0.00028619796
    %v121 = vmul.f32 %v118, %v120
    %v122 = vadd.f32 %v121, 0.0036580483
    %v123 = vmul.f32 %v118, %v122
    %v124 = vadd.f32 %v123, 0.05243302
    %v125 = vmul.f32 %v118, %v124
    %v126 = vadd.f32 %v125, 0.18741608
    %v127 = vmul.f32 %v118, %v126
    %v128 = vadd.f32 %v127, 1.1283791
    %v129 = vmul.f32 %v115, %v128
    %v130 = vmul.f32 %v118, 3.8918573e-05
    %v131 = vadd.f32 %v130, 0.001143296
    %v132 = vmul.f32 %v118, %v131
    %v133 = vadd.f32 %v132, 0.014752088
    %v134 = vmul.f32 %v118, %v133
    %v135 = vadd.f32 %v134, 0.112945676
    %v136 = vmul.f32 %v118, %v135
    %v137 = vadd.f32 %v136, 0.4994258
    %v138 = vmul.f32 %v118, %v137
    %v139 = vadd.f32 %v138, 1.0
    %v140 = vrcp.pop %v139
    %v141 = vmul.f32 %v139, %v140
    %v142 = vsub.f32 1.0, %v141
    %v143 = vmul.f32 %v140, %v142
    %v144 = vadd.f32 %v140, %v143
    %vm145 = vweird.f32 %v139
    %vm146 = vweird.f32 %v140
    %vm147 = vmor %vm145, %vm146
    %v148 = vsel %vm147, %v140, %v144
    %v149 = vand.u32 2147483647, %v139
    %vm150 = vcmp.eq.f32.partialorder %v149, 8.507059e+37
    %v151 = vand.u32 %v139, 2147483648
    %v152 = vor.u32 1.1754944e-38, %v151
    %v153 = vsel %vm150, %v152, %v148
    %v154 = vmul.f32 %v129, %v153
    %v155 = vmin.f32 %v154, 1.0
    %v156 = vmax.f32 %v155, -1.0
    %v157 = vmul.f32 %v116, %v116
    %v158 = vmin.f32 16.0, %v157
    %v159 = vmul.f32 %v158, 2.1237322e-06
    %v160 = vadd.f32 %v159, 0.00028619796
    %v161 = vmul.f32 %v158, %v160
    %v162 = vadd.f32 %v161, 0.0036580483
    %v163 = vmul.f32 %v158, %v162
    %v164 = vadd.f32 %v163, 0.05243302
    %v165 = vmul.f32 %v158, %v164
    %v166 = vadd.f32 %v165, 0.18741608
    %v167 = vmul.f32 %v158, %v166
    %v168 = vadd.f32 %v167, 1.1283791
    %v169 = vmul.f32 %v116, %v168
    %v170 = vmul.f32 %v158, 3.8918573e-05
    %v171 = vadd.f32 %v170, 0.001143296
    %v172 = vmul.f32 %v158, %v171
    %v173 = vadd.f32 %v172, 0.014752088
    %v174 = vmul.f32 %v158, %v173
    %v175 = vadd.f32 %v174, 0.112945676
    %v176 = vmul.f32 %v158, %v175
    %v177 = vadd.f32 %v176, 0.4994258
    %v178 = vmul.f32 %v158, %v177
    %v179 = vadd.f32 %v178, 1.0
    %v180 = vrcp.pop %v179
    %v181 = vmul.f32 %v179, %v180
    %v182 = vsub.f32 1.0, %v181
    %v183 = vmul.f32 %v180, %v182
    %v184 = vadd.f32 %v180, %v183
    %vm185 = vweird.f32 %v179
    %vm186 = vweird.f32 %v180
    %vm187 = vmor %vm185, %vm186
    %v188 = vsel %vm187, %v180, %v184
    %v189 = vand.u32 2147483647, %v179
    %vm190 = vcmp.eq.f32.partialorder %v189, 8.507059e+37
    %v191 = vand.u32 %v179, 2147483648
    %v192 = vor.u32 1.1754944e-38, %v191
    %v193 = vsel %vm190, %v192, %v188
    %v194 = vmul.f32 %v169, %v193
    %v195 = vmin.f32 %v194, 1.0
    %v196 = vmax.f32 %v195, -1.0
    %v197 = vadd.f32 %v156, 1.0
    %v198 = vadd.f32 %v196, 1.0
    %v199 = vmul.f32 %v113, %v197
    %v200 = vmul.f32 %v114, %v198
    %v201 = vld [vmem:[#allocation7] sm:$0xff]
    %v202 = vld [vmem:[#allocation7 + $0x8] sm:$0xff]
    %v203 = vld [vmem:[#allocation7 + $0x10] sm:$0xff]
    %v204 = vld [vmem:[#allocation7 + $0x18] sm:$0xff]
    %v205 = vld [vmem:[#allocation7 + $0x20] sm:$0xff]
    %v206 = vld [vmem:[#allocation7 + $0x28] sm:$0xff]
    %v207 = vld [vmem:[#allocation7 + $0x30] sm:$0xff]
    %v208 = vld [vmem:[#allocation7 + $0x38] sm:$0xff]
    %v209 = vld [vmem:[#allocation7 + $0x40] sm:$0xff]
    %v210 = vld [vmem:[#allocation7 + $0x48] sm:$0xff]
    %v211 = vld [vmem:[#allocation7 + $0x50] sm:$0xff]
    %v212 = vld [vmem:[#allocation7 + $0x58] sm:$0xff]
    %v213 = vld [vmem:[#allocation7 + $0x60] sm:$0xff]
    %v214 = vld [vmem:[#allocation7 + $0x68] sm:$0xff]
    %v215 = vld [vmem:[#allocation7 + $0x70] sm:$0xff]
    %v216 = vld [vmem:[#allocation7 + $0x78] sm:$0xff]
    %v217 = vld [vmem:[%s4] sm:$0x1]
    %v219 = vperm.slane %v217, 0
    %221 = vmatpush.msra.mxu0 %v216
    %222 = vmatpush.msra.mxu0 %v215
    %223 = vmatpush.msra.mxu0 %v214
    %224 = vmatpush.msra.mxu0 %v213
    %225 = vmatpush.msra.mxu0 %v212
    %226 = vmatpush.msra.mxu0 %v211
    %227 = vmatpush.msra.mxu0 %v210
    %228 = vmatpush.msra.mxu0 %v209
    %229 = vmatpush.msra.mxu0 %v208
    %230 = vmatpush.msra.mxu0 %v207
    %231 = vmatpush.msra.mxu0 %v206
    %232 = vmatpush.msra.mxu0 %v205
    %233 = vmatpush.msra.mxu0 %v204
    %234 = vmatpush.msra.mxu0 %v203
    %235 = vmatpush.msra.mxu0 %v202
    %236 = vmatpush.msra.mxu0 %v201
    %237 = vmatmul.f32.gmra.mxu0 %v199
    %v238 = vpop.f32.mrf.mxu0
    %v239 = vadd.f32 %v219, %v238
    %240 = vmatmul.f32.gmra.mxu0 %v200
    %v241 = vpop.f32.mrf.mxu0
    %v242 = vadd.f32 %v219, %v241
    %243 = vdwg.mxu0
    %244 = vst [vmem:[#allocation8] sm:$0xff] %v239
    %245 = vst [vmem:[#allocation8 + $0x8] sm:$0xff] %v242
    // Predicated region
    $region34: #{tpu_custom_call.1} parent=1 // pred_check
      _
    $region35: #{tpu_custom_call.1} parent=1 // pred_check_branch
      %247 = sbr.rel (0) target = $region37
    $region36: #{tpu_custom_call.1} parent=1 // pred_region
      %249 = vsyncadd [#allocation4], 0
      %s250 = sshll.u32 [#allocation8], 4
      %s251 = int_to_ptr.vmem [resolvable:$true] %s250
      %s252 = sshll.u32 %s5, 4
      %s253 = int_to_ptr.hbm [resolvable:$true] %s252
      %258 = dma.vmem_to_hbm [thread:$0]  %s251, 256, %s253, [#allocation4], 128, 128, 8
    $region37: #{tpu_custom_call.1} parent=1 // pred_fallthru
      _
    // Predicated region
    $region38: #{tpu_custom_call.1} parent=1 // pred_check
      _
    $region39: #{tpu_custom_call.1} parent=1 // pred_check_branch
      %260 = sbr.rel (0) target = $region41
    $region40: #{tpu_custom_call.1} parent=1 // pred_region
      %262 = dma.done [#allocation4], 256
    $region41: #{tpu_custom_call.1} parent=1 // pred_fallthru
      _
    %263 = vsyncpa [#allocation3], 1
    %264 = vsyncpa [#allocation6], 1
    %265 = vsyncpa [#allocation4], 1

// kernel: tpu_custom_call.1
$region0: #{tpu_custom_call.1}
  #allocation0 [shape = 'u32[]', space=smem, size = 0x4, offset = 0x4, fixed_abs, tag = 'smem constant byte address 0x4 - core index']
  #allocation1 [shape = 'u32[72,128]{1,0:T(1,128)}', space=vmem, size = 0x9000, scoped, tag = 'internal scratch']
  %s0 = inlined_call_operand.hbm [shape: f32[16,128], index: 0, kind: input, shape index: {}]
  %s1 = inlined_call_operand.hbm [shape: f32[128,128], index: 1, kind: input, shape index: {}]
  %s2 = inlined_call_operand.vmem [shape: f32[1,128], index: 2, kind: input, shape index: {}]
  %s3 = inlined_call_operand.hbm [shape: f32[128,128], index: 3, kind: input, shape index: {}]
  %s4 = inlined_call_operand.vmem [shape: f32[1,128], index: 4, kind: input, shape index: {}]
  %s5 = inlined_call_operand.hbm [shape: f32[16,128], index: 5, kind: output, shape index: {}]
  %s6 = sld [smem:[#allocation0]]
  $region42: #{tpu_custom_call.1} parent=0
    _
  %s8 = ssub.s32 1, %s6
  %s9 = scalar_select 0, %s8, %s6
  $region1: #{tpu_custom_call.1} parent=0
    #allocation2 [shape = 'u8[8192]{0}', space=vmem, size = 0x2000, scoped, tag = 'input window, operand 0, single buffered']
    #allocation3 [shape = 's32[1]{0}', space=sflag, size = 0x4, scoped, tag = 'scoped memory for tpu_custom_call.1']
    #allocation4 [shape = 's32[1]{0}', space=sflag, size = 0x4, scoped, tag = 'scoped memory for tpu_custom_call.1']
    #allocation5 [shape = 'u8[65536]{0}', space=vmem, size = 0x10000, scoped, tag = 'input window, operand 1, single buffered']
    #allocation6 [shape = 's32[1]{0}', space=sflag, size = 0x4, scoped, tag = 'scoped memory for tpu_custom_call.1']
    #allocation7 [shape = 'u8[65536]{0}', space=vmem, size = 0x10000, scoped, tag = 'input window, operand 3, single buffered']
    #allocation8 [shape = 'u8[8192]{0}', space=vmem, size = 0x2000, scoped, tag = 'output window, operand 0, single buffered']
    %10 = vsyncpa [#allocation3], 0
    %11 = vsyncpa [#allocation6], 0
    %12 = vsyncpa [#allocation4], 0
    // Predicated region
    $region2: #{tpu_custom_call.1} parent=1 // pred_check
      _
    $region3: #{tpu_custom_call.1} parent=1 // pred_check_branch
      %14 = sbr.rel (0) target = $region5
    $region4: #{tpu_custom_call.1} parent=1 // pred_region
      %16 = vsyncadd [#allocation3], 0
      %s17 = sshll.u32 %s0, 4
      %s18 = int_to_ptr.hbm [resolvable:$true] %s17
      %s19 = sshll.u32 [#allocation2], 4
      %s20 = int_to_ptr.vmem [resolvable:$true] %s19
      %25 = dma.hbm_to_vmem [thread:$0]  %s18, 256, %s20, [#allocation3], 128, 128, 8
    $region5: #{tpu_custom_call.1} parent=1 // pred_fallthru
      _
    // Predicated region
    $region6: #{tpu_custom_call.1} parent=1 // pred_check
      _
    $region7: #{tpu_custom_call.1} parent=1 // pred_check_branch
      %27 = sbr.rel (0) target = $region9
    $region8: #{tpu_custom_call.1} parent=1 // pred_region
      %29 = vsyncadd [#allocation6], 0
      %s30 = sshll.u32 %s1, 4
      %s31 = int_to_ptr.hbm [resolvable:$true] %s30
      %s32 = sshll.u32 [#allocation5], 4
      %s33 = int_to_ptr.vmem [resolvable:$true] %s32
      %38 = dma.hbm_to_vmem [thread:$0]  %s31, 2048, %s33, [#allocation6], 128, 128, 8
    $region9: #{tpu_custom_call.1} parent=1 // pred_fallthru
      _
    // Predicated region
    $region10: #{tpu_custom_call.1} parent=1 // pred_check
      _
    $region11: #{tpu_custom_call.1} parent=1 // pred_check_branch
      %40 = sbr.rel (0) target = $region13
    $region12: #{tpu_custom_call.1} parent=1 // pred_region
      _
    $region13: #{tpu_custom_call.1} parent=1 // pred_fallthru
      _
    // Predicated region
    $region14: #{tpu_custom_call.1} parent=1 // pred_check
      _
    $region15: #{tpu_custom_call.1} parent=1 // pred_check_branch
      %42 = sbr.rel (0) target = $region17
    $region16: #{tpu_custom_call.1} parent=1 // pred_region
      %44 = vsyncadd [#allocation6], 0
      %s45 = sshll.u32 %s3, 4
      %s46 = int_to_ptr.hbm [resolvable:$true] %s45
      %s47 = sshll.u32 [#allocation7], 4
      %s48 = int_to_ptr.vmem [resolvable:$true] %s47
      %53 = dma.hbm_to_vmem [thread:$0]  %s46, 2048, %s48, [#allocation6], 128, 128, 8
    $region17: #{tpu_custom_call.1} parent=1 // pred_fallthru
      _
    // Predicated region
    $region18: #{tpu_custom_call.1} parent=1 // pred_check
      _
    $region19: #{tpu_custom_call.1} parent=1 // pred_check_branch
      %55 = sbr.rel (0) target = $region21
    $region20: #{tpu_custom_call.1} parent=1 // pred_region
      _
    $region21: #{tpu_custom_call.1} parent=1 // pred_fallthru
      _
    // Predicated region
    $region22: #{tpu_custom_call.1} parent=1 // pred_check
      _
    $region23: #{tpu_custom_call.1} parent=1 // pred_check_branch
      %57 = sbr.rel (0) target = $region25
    $region24: #{tpu_custom_call.1} parent=1 // pred_region
      %59 = dma.done [#allocation3], 256
    $region25: #{tpu_custom_call.1} parent=1 // pred_fallthru
      _
    // Predicated region
    $region26: #{tpu_custom_call.1} parent=1 // pred_check
      _
    $region27: #{tpu_custom_call.1} parent=1 // pred_check_branch
      %61 = sbr.rel (0) target = $region29
    $region28: #{tpu_custom_call.1} parent=1 // pred_region
      %63 = dma.done [#allocation6], 2048
    $region29: #{tpu_custom_call.1} parent=1 // pred_fallthru
      _
    // Predicated region
    $region30: #{tpu_custom_call.1} parent=1 // pred_check
      _
    $region31: #{tpu_custom_call.1} parent=1 // pred_check_branch
      %65 = sbr.rel (0) target = $region33
    $region32: #{tpu_custom_call.1} parent=1 // pred_region
      %67 = dma.done [#allocation6], 2048
    $region33: #{tpu_custom_call.1} parent=1 // pred_fallthru
      _
    %v68 = vld [vmem:[#allocation2] sm:$0xff]
    %v69 = vld [vmem:[#allocation2 + $0x8] sm:$0xff]
    %v70 = vld [vmem:[#allocation5] sm:$0xff]
    %v71 = vld [vmem:[#allocation5 + $0x8] sm:$0xff]
    %v72 = vld [vmem:[#allocation5 + $0x10] sm:$0xff]
    %v73 = vld [vmem:[#allocation5 + $0x18] sm:$0xff]
    %v74 = vld [vmem:[#allocation5 + $0x20] sm:$0xff]
    %v75 = vld [vmem:[#allocation5 + $0x28] sm:$0xff]
    %v76 = vld [vmem:[#allocation5 + $0x30] sm:$0xff]
    %v77 = vld [vmem:[#allocation5 + $0x38] sm:$0xff]
    %v78 = vld [vmem:[#allocation5 + $0x40] sm:$0xff]
    %v79 = vld [vmem:[#allocation5 + $0x48] sm:$0xff]
    %v80 = vld [vmem:[#allocation5 + $0x50] sm:$0xff]
    %v81 = vld [vmem:[#allocation5 + $0x58] sm:$0xff]
    %v82 = vld [vmem:[#allocation5 + $0x60] sm:$0xff]
    %v83 = vld [vmem:[#allocation5 + $0x68] sm:$0xff]
    %v84 = vld [vmem:[#allocation5 + $0x70] sm:$0xff]
    %v85 = vld [vmem:[#allocation5 + $0x78] sm:$0xff]
    %v86 = vld [vmem:[%s2] sm:$0x1]
    %v88 = vperm.slane %v86, 0
    %90 = vmatpush.msra.mxu0 %v85
    %91 = vmatpush.msra.mxu0 %v84
    %92 = vmatpush.msra.mxu0 %v83
    %93 = vmatpush.msra.mxu0 %v82
    %94 = vmatpush.msra.mxu0 %v81
    %95 = vmatpush.msra.mxu0 %v80
    %96 = vmatpush.msra.mxu0 %v79
    %97 = vmatpush.msra.mxu0 %v78
    %98 = vmatpush.msra.mxu0 %v77
    %99 = vmatpush.msra.mxu0 %v76
    %100 = vmatpush.msra.mxu0 %v75
    %101 = vmatpush.msra.mxu0 %v74
    %102 = vmatpush.msra.mxu0 %v73
    %103 = vmatpush.msra.mxu0 %v72
    %104 = vmatpush.msra.mxu0 %v71
    %105 = vmatpush.msra.mxu0 %v70
    %106 = vmatmul.f32.gmra.mxu0 %v68
    %v107 = vpop.f32.mrf.mxu0
    %v108 = vadd.f32 %v88, %v107
    %109 = vmatmul.f32.gmra.mxu0 %v69
    %v110 = vpop.f32.mrf.mxu0
    %v111 = vadd.f32 %v88, %v110
    %112 = vdwg.mxu0
    %v113 = vmul.f32 %v108, 0.5
    %v114 = vmul.f32 %v111, 0.5
    %v115 = vmul.f32 %v108, 0.70710677
    %v116 = vmul.f32 %v111, 0.70710677
    %v117 = vmul.f32 %v115, %v115
    %v118 = vmin.f32 16.0, %v117
    %v119 = vmul.f32 %v118, 2.1237322e-06
    %v120 = vadd.f32 %v119, 0.00028619796
    %v121 = vmul.f32 %v118, %v120
    %v122 = vadd.f32 %v121, 0.0036580483
    %v123 = vmul.f32 %v118, %v122
    %v124 = vadd.f32 %v123, 0.05243302
    %v125 = vmul.f32 %v118, %v124
    %v126 = vadd.f32 %v125, 0.18741608
    %v127 = vmul.f32 %v118, %v126
    %v128 = vadd.f32 %v127, 1.1283791
    %v129 = vmul.f32 %v115, %v128
    %v130 = vmul.f32 %v118, 3.8918573e-05
    %v131 = vadd.f32 %v130, 0.001143296
    %v132 = vmul.f32 %v118, %v131
    %v133 = vadd.f32 %v132, 0.014752088
    %v134 = vmul.f32 %v118, %v133
    %v135 = vadd.f32 %v134, 0.112945676
    %v136 = vmul.f32 %v118, %v135
    %v137 = vadd.f32 %v136, 0.4994258
    %v138 = vmul.f32 %v118, %v137
    %v139 = vadd.f32 %v138, 1.0
    %v140 = vrcp.pop %v139
    %v141 = vmul.f32 %v139, %v140
    %v142 = vsub.f32 1.0, %v141
    %v143 = vmul.f32 %v140, %v142
    %v144 = vadd.f32 %v140, %v143
    %vm145 = vweird.f32 %v139
    %vm146 = vweird.f32 %v140
    %vm147 = vmor %vm145, %vm146
    %v148 = vsel %vm147, %v140, %v144
    %v149 = vand.u32 2147483647, %v139
    %vm150 = vcmp.eq.f32.partialorder %v149, 8.507059e+37
    %v151 = vand.u32 %v139, 2147483648
    %v152 = vor.u32 1.1754944e-38, %v151
    %v153 = vsel %vm150, %v152, %v148
    %v154 = vmul.f32 %v129, %v153
    %v155 = vmin.f32 %v154, 1.0
    %v156 = vmax.f32 %v155, -1.0
    %v157 = vmul.f32 %v116, %v116
    %v158 = vmin.f32 16.0, %v157
    %v159 = vmul.f32 %v158, 2.1237322e-06
    %v160 = vadd.f32 %v159, 0.00028619796
    %v161 = vmul.f32 %v158, %v160
    %v162 = vadd.f32 %v161, 0.0036580483
    %v163 = vmul.f32 %v158, %v162
    %v164 = vadd.f32 %v163, 0.05243302
    %v165 = vmul.f32 %v158, %v164
    %v166 = vadd.f32 %v165, 0.18741608
    %v167 = vmul.f32 %v158, %v166
    %v168 = vadd.f32 %v167, 1.1283791
    %v169 = vmul.f32 %v116, %v168
    %v170 = vmul.f32 %v158, 3.8918573e-05
    %v171 = vadd.f32 %v170, 0.001143296
    %v172 = vmul.f32 %v158, %v171
    %v173 = vadd.f32 %v172, 0.014752088
    %v174 = vmul.f32 %v158, %v173
    %v175 = vadd.f32 %v174, 0.112945676
    %v176 = vmul.f32 %v158, %v175
    %v177 = vadd.f32 %v176, 0.4994258
    %v178 = vmul.f32 %v158, %v177
    %v179 = vadd.f32 %v178, 1.0
    %v180 = vrcp.pop %v179
    %v181 = vmul.f32 %v179, %v180
    %v182 = vsub.f32 1.0, %v181
    %v183 = vmul.f32 %v180, %v182
    %v184 = vadd.f32 %v180, %v183
    %vm185 = vweird.f32 %v179
    %vm186 = vweird.f32 %v180
    %vm187 = vmor %vm185, %vm186
    %v188 = vsel %vm187, %v180, %v184
    %v189 = vand.u32 2147483647, %v179
    %vm190 = vcmp.eq.f32.partialorder %v189, 8.507059e+37
    %v191 = vand.u32 %v179, 2147483648
    %v192 = vor.u32 1.1754944e-38, %v191
    %v193 = vsel %vm190, %v192, %v188
    %v194 = vmul.f32 %v169, %v193
    %v195 = vmin.f32 %v194, 1.0
    %v196 = vmax.f32 %v195, -1.0
    %v197 = vadd.f32 %v156, 1.0
    %v198 = vadd.f32 %v196, 1.0
    %v199 = vmul.f32 %v113, %v197
    %v200 = vmul.f32 %v114, %v198
    %v201 = vld [vmem:[#allocation7] sm:$0xff]
    %v202 = vld [vmem:[#allocation7 + $0x8] sm:$0xff]
    %v203 = vld [vmem:[#allocation7 + $0x10] sm:$0xff]
    %v204 = vld [vmem:[#allocation7 + $0x18] sm:$0xff]
    %v205 = vld [vmem:[#allocation7 + $0x20] sm:$0xff]
    %v206 = vld [vmem:[#allocation7 + $0x28] sm:$0xff]
    %v207 = vld [vmem:[#allocation7 + $0x30] sm:$0xff]
    %v208 = vld [vmem:[#allocation7 + $0x38] sm:$0xff]
    %v209 = vld [vmem:[#allocation7 + $0x40] sm:$0xff]
    %v210 = vld [vmem:[#allocation7 + $0x48] sm:$0xff]
    %v211 = vld [vmem:[#allocation7 + $0x50] sm:$0xff]
    %v212 = vld [vmem:[#allocation7 + $0x58] sm:$0xff]
    %v213 = vld [vmem:[#allocation7 + $0x60] sm:$0xff]
    %v214 = vld [vmem:[#allocation7 + $0x68] sm:$0xff]
    %v215 = vld [vmem:[#allocation7 + $0x70] sm:$0xff]
    %v216 = vld [vmem:[#allocation7 + $0x78] sm:$0xff]
    %v217 = vld [vmem:[%s4] sm:$0x1]
    %v219 = vperm.slane %v217, 0
    %221 = vmatpush.msra.mxu0 %v216
    %222 = vmatpush.msra.mxu0 %v215
    %223 = vmatpush.msra.mxu0 %v214
    %224 = vmatpush.msra.mxu0 %v213
    %225 = vmatpush.msra.mxu0 %v212
    %226 = vmatpush.msra.mxu0 %v211
    %227 = vmatpush.msra.mxu0 %v210
    %228 = vmatpush.msra.mxu0 %v209
    %229 = vmatpush.msra.mxu0 %v208
    %230 = vmatpush.msra.mxu0 %v207
    %231 = vmatpush.msra.mxu0 %v206
    %232 = vmatpush.msra.mxu0 %v205
    %233 = vmatpush.msra.mxu0 %v204
    %234 = vmatpush.msra.mxu0 %v203
    %235 = vmatpush.msra.mxu0 %v202
    %236 = vmatpush.msra.mxu0 %v201
    %237 = vmatmul.f32.gmra.mxu0 %v199
    %v238 = vpop.f32.mrf.mxu0
    %v239 = vadd.f32 %v219, %v238
    %240 = vmatmul.f32.gmra.mxu0 %v200
    %v241 = vpop.f32.mrf.mxu0
    %v242 = vadd.f32 %v219, %v241
    %243 = vdwg.mxu0
    %244 = vst [vmem:[#allocation8] sm:$0xff] %v239
    %245 = vst [vmem:[#allocation8 + $0x8] sm:$0xff] %v242
    // Predicated region
    $region34: #{tpu_custom_call.1} parent=1 // pred_check
      _
    $region35: #{tpu_custom_call.1} parent=1 // pred_check_branch
      %247 = sbr.rel (0) target = $region37
    $region36: #{tpu_custom_call.1} parent=1 // pred_region
      %249 = vsyncadd [#allocation4], 0
      %s250 = sshll.u32 [#allocation8], 4
      %s251 = int_to_ptr.vmem [resolvable:$true] %s250
      %s252 = sshll.u32 %s5, 4
      %s253 = int_to_ptr.hbm [resolvable:$true] %s252
      %258 = dma.vmem_to_hbm [thread:$0]  %s251, 256, %s253, [#allocation4], 128, 128, 8
    $region37: #{tpu_custom_call.1} parent=1 // pred_fallthru
      _
    // Predicated region
    $region38: #{tpu_custom_call.1} parent=1 // pred_check
      _
    $region39: #{tpu_custom_call.1} parent=1 // pred_check_branch
      %260 = sbr.rel (0) target = $region41
    $region40: #{tpu_custom_call.1} parent=1 // pred_region
      %262 = dma.done [#allocation4], 256
    $region41: #{tpu_custom_call.1} parent=1 // pred_fallthru
      _
    %263 = vsyncpa [#allocation3], 1
    %264 = vsyncpa [#allocation6], 1
    %265 = vsyncpa [#allocation4], 1

</llo_original>
